<compile_context>
chip_gen: v7x
topology: tpu7x:2x2x1
jax: 0.10.0
libtpu: 0.0.40
codegen_flags: <defaults>
</compile_context>

<pallas_src>
import math
from functools import partial

import jax
import jax.numpy as jnp
from jax.experimental import pallas as pl
from jax.experimental.pallas import tpu as pltpu


# ----------------------------------------------------------------------------- kernel
def _ada_block_kernel(
    x_ref, ca_ref, ck_ref, dproj_ref,          # sequence / per-step inputs
    wdil_ref, wcr_ref, wada_ref, wout_ref,     # fused matmul weights (compute dtype)
    vecs_ref,                                  # packed biases / GroupNorm gains (f32)
    out_ref, skip_ref,
    *, dilation: int, use_norm: bool, compute_dtype, eps: float = 1e-5,
):
    x = x_ref[0]          # (C, L)  f32
    ca = ca_ref[0]        # (C, L)  cond_audio
    ck = ck_ref[0]        # (C, L)  cond_keyla
    dproj = dproj_ref[0]  # (C, 1)  precomputed diffusion projection column

    C, L = x.shape
    d = dilation
    cd = compute_dtype

    # packed vectors: [bdil | g1 | b1 | bcr | g2 | b2 | bada | bout] along sublanes
    vecs = vecs_ref[...]                        # (18C, 1) f32
    bdil = vecs[0 * C: 2 * C]
    g1 = vecs[2 * C: 4 * C]
    b1 = vecs[4 * C: 6 * C]
    bcr = vecs[6 * C: 8 * C]
    g2 = vecs[8 * C:10 * C]
    b2 = vecs[10 * C:12 * C]
    bada = vecs[12 * C:16 * C]
    bout = vecs[16 * C:18 * C]

    # y = x + diffusion_projection(diffusion_step)  (broadcast over L)
    y = x + dproj                                                     # (C, L) f32

    # dilated_conv: Conv1d(C -> 2C, k=3, padding=dilation, dilation=dilation).
    # Taps via XLU lane-rolls + boundary masks (zero padding); fused into ONE
    # matmul with K = 3C by sublane-stacking the three taps.
    lane = jax.lax.broadcasted_iota(jnp.int32, (C, L), 1)
    tap_left = jnp.where(lane >= d, pltpu.roll(y, shift=d, axis=1), 0.0)          # y[:, t-d]
    tap_right = jnp.where(lane < L - d, pltpu.roll(y, shift=L - d, axis=1), 0.0)  # y[:, t+d]
    stacked = jnp.concatenate([tap_left, y, tap_right], axis=0).astype(cd)        # (3C, L)
    conv = jnp.dot(wdil_ref[...], stacked,
                   preferred_element_type=jnp.float32) + bdil                      # (2C, L)

    def group_norm(t, gamma, beta):
        # GroupNorm with num_groups == num_channels: per-channel norm over L (biased var).
        mu = jnp.mean(t, axis=1, keepdims=True)
        var = jnp.mean(jnp.square(t - mu), axis=1, keepdims=True)
        return (t - mu) * jax.lax.rsqrt(var + eps) * gamma + beta

    h = group_norm(conv, g1, b1) if use_norm else conv

    # concat_reduce: Conv1d(3C -> 2C, k=1) on cat([h, cond_keyla], dim=1);
    # one matmul with K = 3C on the sublane-stacked operand.
    hk = jnp.concatenate([h, ck], axis=0).astype(cd)                  # (3C, L)
    y2 = jnp.dot(wcr_ref[...], hk, preferred_element_type=jnp.float32) + bcr      # (2C, L)

    y2n = group_norm(y2, g2, b2) if use_norm else y2

    # ada_modulation: SiLU -> Conv1d(C -> 4C, k=1); chunk(2, dim=1) -> shift, scale
    ca_silu = (ca * jax.nn.sigmoid(ca)).astype(cd)
    ada = jnp.dot(wada_ref[...], ca_silu,
                  preferred_element_type=jnp.float32) + bada                       # (4C, L)
    shift = ada[: 2 * C]
    scale = ada[2 * C:]

    ym = y2n * (1.0 + scale) + shift      # modulateseq

    gate = ym[:C]
    filt = ym[C:]
    z = (jax.nn.sigmoid(gate) * jnp.tanh(filt)).astype(cd)            # (C, L)

    # output_projection: Conv1d(C -> 2C, k=1); chunk -> residual, skip
    yo = jnp.dot(wout_ref[...], z, preferred_element_type=jnp.float32) + bout      # (2C, L)
    residual = yo[:C]
    skip = yo[C:]

    out_ref[0] = ((x + residual) * (1.0 / math.sqrt(2.0))).astype(out_ref.dtype)
    skip_ref[0] = skip.astype(skip_ref.dtype)


# ----------------------------------------------------------------------------- wrapper
def ada_concate_norm_residual_block(x, cond_audio, cond_keyla, diffusion_step, params,
                                    *, dilation, use_norm=True,
                                    compute_dtype=jnp.bfloat16):
    B, C, L = x.shape
    assert C % 8 == 0, "residual_channels must be a multiple of 8 (sublane alignment)"
    assert L % 128 == 0, "sequence length must be a multiple of 128 (lane alignment)"
    p = params

    # Diffusion projection off the MXU (N=1 matvec): tiny B*C^2 GEMM in the wrapper,
    # overlaps with kernel launch.  Passed to the kernel as a (B, C, 1) column.
    dproj = (diffusion_step @ p["wdiff"].T + p["bdiff"])[:, :, None].astype(jnp.float32)

    # Fused matmul weights (cast to compute dtype; activations cast at the dot sites).
    wdil_f = jnp.concatenate(
        [p["wdil"][:, :, 0], p["wdil"][:, :, 1], p["wdil"][:, :, 2]], axis=1
    ).astype(compute_dtype)                                           # (2C, 3C)
    wcr_f = p["wcr"][:, :, 0].astype(compute_dtype)                   # (2C, 3C)
    wada_f = p["wada"][:, :, 0].astype(compute_dtype)                 # (4C, C)
    wout_f = p["wout"][:, :, 0].astype(compute_dtype)                 # (2C, C)

    # Pack all tiny bias / gain vectors into one (18C, 1) f32 column (one DMA).
    vecs = jnp.concatenate(
        [p["bdil"], p["g1"], p["b1"], p["bcr"], p["g2"], p["b2"], p["bada"], p["bout"]]
    )[:, None].astype(jnp.float32)                                    # (18C, 1)

    inputs = [x, cond_audio, cond_keyla, dproj, wdil_f, wcr_f, wada_f, wout_f, vecs]

    seq_spec = pl.BlockSpec((1, C, L), lambda b: (b, 0, 0))
    dproj_spec = pl.BlockSpec((1, C, 1), lambda b: (b, 0, 0))

    def full_spec(a):  # small weights: whole array, constant index map (resident)
        nd = a.ndim
        return pl.BlockSpec(a.shape, lambda b: (0,) * nd)

    in_specs = [seq_spec, seq_spec, seq_spec, dproj_spec] + [full_spec(a) for a in inputs[4:]]
    out_shape = (jax.ShapeDtypeStruct((B, C, L), x.dtype),
                 jax.ShapeDtypeStruct((B, C, L), x.dtype))
    out_specs = (pl.BlockSpec((1, C, L), lambda b: (b, 0, 0)),
                 pl.BlockSpec((1, C, L), lambda b: (b, 0, 0)))

    kernel = partial(_ada_block_kernel, dilation=dilation, use_norm=use_norm,
                     compute_dtype=compute_dtype)
    # TODO(synk): for very large L, add an L-tile grid axis with a two-pass (stats /
    # apply) GroupNorm so the per-step slab fits v7x's 64 MiB VMEM budget.
    return pl.pallas_call(
        kernel,
        out_shape=out_shape,
        grid_spec=pltpu.PrefetchScalarGridSpec(
            num_scalar_prefetch=0,
            grid=(B,),
            in_specs=in_specs,
            out_specs=out_specs,
        ),
        compiler_params=pltpu.CompilerParams(
            dimension_semantics=("parallel",),
            vmem_limit_bytes=48 * 1024 * 1024,
        ),
    )(*inputs)


# ----------------------------------------------------------------------------- params
def init_params(key, C):
    ks = jax.random.split(key, 14)

    def kaiming(k, shape):
        fan_in = shape[1] * (shape[2] if len(shape) == 3 else 1)
        return jax.random.normal(k, shape, jnp.float32) * math.sqrt(2.0 / fan_in)

    return dict(
        wdil=kaiming(ks[0], (2 * C, C, 3)),
        bdil=0.1 * jax.random.normal(ks[1], (2 * C,), jnp.float32),
        wdiff=kaiming(ks[2], (C, C)),
        bdiff=0.1 * jax.random.normal(ks[3], (C,), jnp.float32),
        wcr=kaiming(ks[4], (2 * C, 3 * C, 1)),
        bcr=0.1 * jax.random.normal(ks[5], (2 * C,), jnp.float32),
        wout=kaiming(ks[6], (2 * C, C, 1)),
        bout=0.1 * jax.random.normal(ks[7], (2 * C,), jnp.float32),
        wada=kaiming(ks[8], (4 * C, C, 1)),
        bada=0.1 * jax.random.normal(ks[9], (4 * C,), jnp.float32),
        g1=1.0 + 0.1 * jax.random.normal(ks[10], (2 * C,), jnp.float32),
        b1=0.05 * jax.random.normal(ks[11], (2 * C,), jnp.float32),
        g2=1.0 + 0.1 * jax.random.normal(ks[12], (2 * C,), jnp.float32),
        b2=0.05 * jax.random.normal(ks[13], (2 * C,), jnp.float32),
    )


# ----------------------------------------------------------------------------- pure-JAX reference (PyTorch semantics, f32)
def reference(x, ca, ck, dstep, p, dilation, use_norm=True):
    dproj = dstep @ p["wdiff"].T + p["bdiff"]
    y = x + dproj[:, :, None]
    conv = jax.lax.conv_general_dilated(
        y, p["wdil"], window_strides=(1,), padding=[(dilation, dilation)],
        rhs_dilation=(dilation,), dimension_numbers=("NCH", "OIH", "NCH"),
    ) + p["bdil"][None, :, None]

    def gn(t, g, b):
        mu = t.mean(axis=2, keepdims=True)
        var = ((t - mu) ** 2).mean(axis=2, keepdims=True)
        return (t - mu) / jnp.sqrt(var + 1e-5) * g[None, :, None] + b[None, :, None]

    h = gn(conv, p["g1"], p["b1"]) if use_norm else conv
    cat = jnp.concatenate([h, ck], axis=1)
    y2 = jnp.einsum("oi,bil->bol", p["wcr"][:, :, 0], cat) + p["bcr"][None, :, None]
    y2n = gn(y2, p["g2"], p["b2"]) if use_norm else y2
    ada = jnp.einsum("oi,bil->bol", p["wada"][:, :, 0], jax.nn.silu(ca)) + p["bada"][None, :, None]
    shift, scale = jnp.split(ada, 2, axis=1)
    ym = y2n * (1.0 + scale) + shift
    gate, filt = jnp.split(ym, 2, axis=1)
    z = jax.nn.sigmoid(gate) * jnp.tanh(filt)
    yo = jnp.einsum("oi,bil->bol", p["wout"][:, :, 0], z) + p["bout"][None, :, None]
    residual, skip = jnp.split(yo, 2, axis=1)
    return (x + residual) / math.sqrt(2.0), skip


# ----------------------------------------------------------------------------- main
if __name__ == "__main__":
    B, C, L = 2, 8, 128          # batch, residual_channels (multiple of 8), sequence length
    dilation = 2
    use_norm = True

    key = jax.random.PRNGKey(0)
    k_in, k_p = jax.random.split(key)
    kx, ka, kk, kd = jax.random.split(k_in, 4)
    x = jax.random.normal(kx, (B, C, L), jnp.float32)
    cond_audio = jax.random.normal(ka, (B, C, L), jnp.float32)
    cond_keyla = jax.random.normal(kk, (B, C, L), jnp.float32)
    diffusion_step = jax.random.normal(kd, (B, C), jnp.float32)
    params = init_params(k_p, C)

    ref_out, ref_skip = reference(x, cond_audio, cond_keyla, diffusion_step, params,
                                  dilation, use_norm)

    # 1) exact-semantics check: f32 matmul path, tight tolerance.
    out32, skip32 = ada_concate_norm_residual_block(
        x, cond_audio, cond_keyla, diffusion_step, params,
        dilation=dilation, use_norm=use_norm, compute_dtype=jnp.float32)
    out32 = jax.block_until_ready(out32)
    skip32 = jax.block_until_ready(skip32)
    assert jnp.allclose(out32, ref_out, atol=1e-4, rtol=1e-4), "f32 out mismatch"
    assert jnp.allclose(skip32, ref_skip, atol=1e-4, rtol=1e-4), "f32 skip mismatch"

    # 2) performance path: bf16 MXU matmuls (f32 accumulation / norms), loose tolerance.
    out16, skip16 = ada_concate_norm_residual_block(
        x, cond_audio, cond_keyla, diffusion_step, params,
        dilation=dilation, use_norm=use_norm, compute_dtype=jnp.bfloat16)
    out16 = jax.block_until_ready(out16)
    skip16 = jax.block_until_ready(skip16)
    assert jnp.allclose(out16, ref_out, atol=2e-1, rtol=2e-1), "bf16 out mismatch"
    assert jnp.allclose(skip16, ref_skip, atol=2e-1, rtol=2e-1), "bf16 skip mismatch"

    print("KERNEL_OK")
</pallas_src>

<mosaic_0001>
module attributes {stable_mosaic.version = 11 : i64} {
  func.func @_ada_block_kernel(%arg0: i32, %arg1: memref<1x8x128xf32, #tpu.memory_space<vmem>>, %arg2: memref<1x8x128xf32, #tpu.memory_space<vmem>>, %arg3: memref<1x8x128xf32, #tpu.memory_space<vmem>>, %arg4: memref<1x8x1xf32, #tpu.memory_space<vmem>>, %arg5: memref<16x24xf32, #tpu.memory_space<vmem>>, %arg6: memref<16x24xf32, #tpu.memory_space<vmem>>, %arg7: memref<32x8xf32, #tpu.memory_space<vmem>>, %arg8: memref<16x8xf32, #tpu.memory_space<vmem>>, %arg9: memref<144x1xf32, #tpu.memory_space<vmem>>, %arg10: memref<1x8x128xf32, #tpu.memory_space<vmem>>, %arg11: memref<1x8x128xf32, #tpu.memory_space<vmem>>) attributes {dimension_semantics = [#tpu.dimension_semantics<parallel>], iteration_bounds = array<i64: 2>, scalar_prefetch = 0 : i64, scratch_operands = 0 : i64, tpu.core_type = #tpu.core_type<tc>, window_params = [{transform_indices = @transform_0, window_bounds = array<i64: 1, 8, 128>}, {transform_indices = @transform_1, window_bounds = array<i64: 1, 8, 128>}, {transform_indices = @transform_2, window_bounds = array<i64: 1, 8, 128>}, {transform_indices = @transform_3, window_bounds = array<i64: 1, 8, 1>}, {pipeline_mode = #tpu.pipeline_mode<synchronous>, transform_indices = @transform_4, window_bounds = array<i64: 16, 24>}, {pipeline_mode = #tpu.pipeline_mode<synchronous>, transform_indices = @transform_5, window_bounds = array<i64: 16, 24>}, {pipeline_mode = #tpu.pipeline_mode<synchronous>, transform_indices = @transform_6, window_bounds = array<i64: 32, 8>}, {pipeline_mode = #tpu.pipeline_mode<synchronous>, transform_indices = @transform_7, window_bounds = array<i64: 16, 8>}, {pipeline_mode = #tpu.pipeline_mode<synchronous>, transform_indices = @transform_8, window_bounds = array<i64: 144, 1>}, {transform_indices = @transform_9, window_bounds = array<i64: 1, 8, 128>}, {transform_indices = @transform_10, window_bounds = array<i64: 1, 8, 128>}]} {
    %c0 = arith.constant 0 : index
    %c0_0 = arith.constant 0 : index
    %c0_1 = arith.constant 0 : index
    %0 = vector.load %arg1[%c0, %c0_0, %c0_1] : memref<1x8x128xf32, #tpu.memory_space<vmem>>, vector<1x8x128xf32>
    %1 = vector.shape_cast %0 : vector<1x8x128xf32> to vector<8x128xf32>
    %c0_2 = arith.constant 0 : index
    %c0_3 = arith.constant 0 : index
    %c0_4 = arith.constant 0 : index
    %2 = vector.load %arg2[%c0_2, %c0_3, %c0_4] : memref<1x8x128xf32, #tpu.memory_space<vmem>>, vector<1x8x128xf32>
    %3 = vector.shape_cast %2 : vector<1x8x128xf32> to vector<8x128xf32>
    %c0_5 = arith.constant 0 : index
    %c0_6 = arith.constant 0 : index
    %c0_7 = arith.constant 0 : index
    %4 = vector.load %arg3[%c0_5, %c0_6, %c0_7] : memref<1x8x128xf32, #tpu.memory_space<vmem>>, vector<1x8x128xf32>
    %5 = vector.shape_cast %4 : vector<1x8x128xf32> to vector<8x128xf32>
    %c0_8 = arith.constant 0 : index
    %c0_9 = arith.constant 0 : index
    %c0_10 = arith.constant 0 : index
    %6 = vector.load %arg4[%c0_8, %c0_9, %c0_10] : memref<1x8x1xf32, #tpu.memory_space<vmem>>, vector<1x8x1xf32>
    %7 = vector.shape_cast %6 : vector<1x8x1xf32> to vector<8x1xf32>
    %c0_11 = arith.constant 0 : index
    %c0_12 = arith.constant 0 : index
    %8 = vector.load %arg9[%c0_11, %c0_12] : memref<144x1xf32, #tpu.memory_space<vmem>>, vector<144x1xf32>
    %9 = vector.extract_strided_slice %8 {offsets = [0, 0], sizes = [16, 1], strides = [1, 1]} : vector<144x1xf32> to vector<16x1xf32>
    %10 = vector.extract_strided_slice %8 {offsets = [16, 0], sizes = [16, 1], strides = [1, 1]} : vector<144x1xf32> to vector<16x1xf32>
    %11 = vector.extract_strided_slice %8 {offsets = [32, 0], sizes = [16, 1], strides = [1, 1]} : vector<144x1xf32> to vector<16x1xf32>
    %12 = vector.extract_strided_slice %8 {offsets = [48, 0], sizes = [16, 1], strides = [1, 1]} : vector<144x1xf32> to vector<16x1xf32>
    %13 = vector.extract_strided_slice %8 {offsets = [64, 0], sizes = [16, 1], strides = [1, 1]} : vector<144x1xf32> to vector<16x1xf32>
    %14 = vector.extract_strided_slice %8 {offsets = [80, 0], sizes = [16, 1], strides = [1, 1]} : vector<144x1xf32> to vector<16x1xf32>
    %15 = vector.extract_strided_slice %8 {offsets = [96, 0], sizes = [32, 1], strides = [1, 1]} : vector<144x1xf32> to vector<32x1xf32>
    %16 = vector.extract_strided_slice %8 {offsets = [128, 0], sizes = [16, 1], strides = [1, 1]} : vector<144x1xf32> to vector<16x1xf32>
    %17 = vector.broadcast %7 : vector<8x1xf32> to vector<8x128xf32>
    %18 = arith.addf %1, %17 : vector<8x128xf32>
    %19 = tpu.iota {dimensions = array<i32: 1>} : vector<8x128xi32>
    %c2_i32 = arith.constant 2 : i32
    %20 = vector.broadcast %c2_i32 : i32 to vector<8x128xi32>
    %21 = arith.cmpi sge, %19, %20 : vector<8x128xi32>
    %c2_i32_13 = arith.constant 2 : i32
    %22 = tpu.dynamic_rotate %18 by %c2_i32_13 dim 1 : vector<8x128xf32>, i32 -> vector<8x128xf32>
    %cst = arith.constant 0.000000e+00 : f32
    %23 = vector.broadcast %cst : f32 to vector<8x128xf32>
    %24 = arith.select %21, %22, %23 : vector<8x128xi1>, vector<8x128xf32>
    %c126_i32 = arith.constant 126 : i32
    %25 = vector.broadcast %c126_i32 : i32 to vector<8x128xi32>
    %26 = arith.cmpi slt, %19, %25 : vector<8x128xi32>
    %c126_i32_14 = arith.constant 126 : i32
    %27 = tpu.dynamic_rotate %18 by %c126_i32_14 dim 1 : vector<8x128xf32>, i32 -> vector<8x128xf32>
    %cst_15 = arith.constant 0.000000e+00 : f32
    %28 = vector.broadcast %cst_15 : f32 to vector<8x128xf32>
    %29 = arith.select %26, %27, %28 : vector<8x128xi1>, vector<8x128xf32>
    %30 = tpu.concatenate %24, %18, %29 in 0 : vector<8x128xf32>, vector<8x128xf32>, vector<8x128xf32> -> vector<24x128xf32>
    %c0_16 = arith.constant 0 : index
    %c0_17 = arith.constant 0 : index
    %31 = vector.load %arg5[%c0_16, %c0_17] : memref<16x24xf32, #tpu.memory_space<vmem>>, vector<16x24xf32>
    %cst_18 = arith.constant dense<0.000000e+00> : vector<16x128xf32>
    %32 = tpu.matmul %31, %30, %cst_18 {dimension_numbers = #tpu.dot_dimension_numbers<[1], [0], [0], [1], [0, 0, 1, 1], [], []>} : vector<16x24xf32>, vector<24x128xf32>, vector<16x128xf32> -> vector<16x128xf32>
    %33 = vector.broadcast %9 : vector<16x1xf32> to vector<16x128xf32>
    %34 = arith.addf %32, %33 : vector<16x128xf32>
    %cst_19 = arith.constant dense<0.000000e+00> : vector<16xf32>
    %35 = vector.multi_reduction <add>, %34, %cst_19 [1] : vector<16x128xf32> to vector<16xf32>
    %36 = vector.shape_cast %35 : vector<16xf32> to vector<16x1xf32>
    %cst_20 = arith.constant 1.280000e+02 : f32
    %37 = vector.broadcast %cst_20 : f32 to vector<16x1xf32>
    %38 = arith.divf %36, %37 : vector<16x1xf32>
    %39 = vector.broadcast %38 : vector<16x1xf32> to vector<16x128xf32>
    %40 = arith.subf %34, %39 : vector<16x128xf32>
    %41 = arith.mulf %40, %40 : vector<16x128xf32>
    %cst_21 = arith.constant dense<0.000000e+00> : vector<16xf32>
    %42 = vector.multi_reduction <add>, %41, %cst_21 [1] : vector<16x128xf32> to vector<16xf32>
    %43 = vector.shape_cast %42 : vector<16xf32> to vector<16x1xf32>
    %cst_22 = arith.constant 1.280000e+02 : f32
    %44 = vector.broadcast %cst_22 : f32 to vector<16x1xf32>
    %45 = arith.divf %43, %44 : vector<16x1xf32>
    %46 = vector.broadcast %38 : vector<16x1xf32> to vector<16x128xf32>
    %47 = arith.subf %34, %46 : vector<16x128xf32>
    %cst_23 = arith.constant 9.99999974E-6 : f32
    %48 = vector.broadcast %cst_23 : f32 to vector<16x1xf32>
    %49 = arith.addf %45, %48 : vector<16x1xf32>
    %50 = math.rsqrt %49 : vector<16x1xf32>
    %51 = vector.broadcast %50 : vector<16x1xf32> to vector<16x128xf32>
    %52 = arith.mulf %47, %51 : vector<16x128xf32>
    %53 = vector.broadcast %10 : vector<16x1xf32> to vector<16x128xf32>
    %54 = arith.mulf %52, %53 : vector<16x128xf32>
    %55 = vector.broadcast %11 : vector<16x1xf32> to vector<16x128xf32>
    %56 = arith.addf %54, %55 : vector<16x128xf32>
    %57 = tpu.concatenate %56, %5 in 0 : vector<16x128xf32>, vector<8x128xf32> -> vector<24x128xf32>
    %c0_24 = arith.constant 0 : index
    %c0_25 = arith.constant 0 : index
    %58 = vector.load %arg6[%c0_24, %c0_25] : memref<16x24xf32, #tpu.memory_space<vmem>>, vector<16x24xf32>
    %cst_26 = arith.constant dense<0.000000e+00> : vector<16x128xf32>
    %59 = tpu.matmul %58, %57, %cst_26 {dimension_numbers = #tpu.dot_dimension_numbers<[1], [0], [0], [1], [0, 0, 1, 1], [], []>} : vector<16x24xf32>, vector<24x128xf32>, vector<16x128xf32> -> vector<16x128xf32>
    %60 = vector.broadcast %12 : vector<16x1xf32> to vector<16x128xf32>
    %61 = arith.addf %59, %60 : vector<16x128xf32>
    %cst_27 = arith.constant dense<0.000000e+00> : vector<16xf32>
    %62 = vector.multi_reduction <add>, %61, %cst_27 [1] : vector<16x128xf32> to vector<16xf32>
    %63 = vector.shape_cast %62 : vector<16xf32> to vector<16x1xf32>
    %cst_28 = arith.constant 1.280000e+02 : f32
    %64 = vector.broadcast %cst_28 : f32 to vector<16x1xf32>
    %65 = arith.divf %63, %64 : vector<16x1xf32>
    %66 = vector.broadcast %65 : vector<16x1xf32> to vector<16x128xf32>
    %67 = arith.subf %61, %66 : vector<16x128xf32>
    %68 = arith.mulf %67, %67 : vector<16x128xf32>
    %cst_29 = arith.constant dense<0.000000e+00> : vector<16xf32>
    %69 = vector.multi_reduction <add>, %68, %cst_29 [1] : vector<16x128xf32> to vector<16xf32>
    %70 = vector.shape_cast %69 : vector<16xf32> to vector<16x1xf32>
    %cst_30 = arith.constant 1.280000e+02 : f32
    %71 = vector.broadcast %cst_30 : f32 to vector<16x1xf32>
    %72 = arith.divf %70, %71 : vector<16x1xf32>
    %73 = vector.broadcast %65 : vector<16x1xf32> to vector<16x128xf32>
    %74 = arith.subf %61, %73 : vector<16x128xf32>
    %cst_31 = arith.constant 9.99999974E-6 : f32
    %75 = vector.broadcast %cst_31 : f32 to vector<16x1xf32>
    %76 = arith.addf %72, %75 : vector<16x1xf32>
    %77 = math.rsqrt %76 : vector<16x1xf32>
    %78 = vector.broadcast %77 : vector<16x1xf32> to vector<16x128xf32>
    %79 = arith.mulf %74, %78 : vector<16x128xf32>
    %80 = vector.broadcast %13 : vector<16x1xf32> to vector<16x128xf32>
    %81 = arith.mulf %79, %80 : vector<16x128xf32>
    %82 = vector.broadcast %14 : vector<16x1xf32> to vector<16x128xf32>
    %83 = arith.addf %81, %82 : vector<16x128xf32>
    %84 = arith.negf %3 : vector<8x128xf32>
    %85 = math.exp %84 : vector<8x128xf32>
    %cst_32 = arith.constant 1.000000e+00 : f32
    %86 = vector.broadcast %cst_32 : f32 to vector<8x128xf32>
    %87 = arith.addf %86, %85 : vector<8x128xf32>
    %88 = arith.divf %86, %87 : vector<8x128xf32>
    %89 = arith.mulf %3, %88 : vector<8x128xf32>
    %c0_33 = arith.constant 0 : index
    %c0_34 = arith.constant 0 : index
    %90 = vector.load %arg7[%c0_33, %c0_34] : memref<32x8xf32, #tpu.memory_space<vmem>>, vector<32x8xf32>
    %cst_35 = arith.constant dense<0.000000e+00> : vector<32x128xf32>
    %91 = tpu.matmul %90, %89, %cst_35 {dimension_numbers = #tpu.dot_dimension_numbers<[1], [0], [0], [1], [0, 0, 1, 1], [], []>} : vector<32x8xf32>, vector<8x128xf32>, vector<32x128xf32> -> vector<32x128xf32>
    %92 = vector.broadcast %15 : vector<32x1xf32> to vector<32x128xf32>
    %93 = arith.addf %91, %92 : vector<32x128xf32>
    %94 = vector.extract_strided_slice %93 {offsets = [0, 0], sizes = [16, 128], strides = [1, 1]} : vector<32x128xf32> to vector<16x128xf32>
    %95 = vector.extract_strided_slice %93 {offsets = [16, 0], sizes = [16, 128], strides = [1, 1]} : vector<32x128xf32> to vector<16x128xf32>
    %cst_36 = arith.constant 1.000000e+00 : f32
    %96 = vector.broadcast %cst_36 : f32 to vector<16x128xf32>
    %97 = arith.addf %96, %95 : vector<16x128xf32>
    %98 = arith.mulf %83, %97 : vector<16x128xf32>
    %99 = arith.addf %98, %94 : vector<16x128xf32>
    %100 = vector.extract_strided_slice %99 {offsets = [0, 0], sizes = [8, 128], strides = [1, 1]} : vector<16x128xf32> to vector<8x128xf32>
    %101 = vector.extract_strided_slice %99 {offsets = [8, 0], sizes = [8, 128], strides = [1, 1]} : vector<16x128xf32> to vector<8x128xf32>
    %102 = arith.negf %100 : vector<8x128xf32>
    %103 = math.exp %102 : vector<8x128xf32>
    %cst_37 = arith.constant 1.000000e+00 : f32
    %104 = vector.broadcast %cst_37 : f32 to vector<8x128xf32>
    %105 = arith.addf %104, %103 : vector<8x128xf32>
    %106 = arith.divf %104, %105 : vector<8x128xf32>
    %107 = math.tanh %101 : vector<8x128xf32>
    %108 = arith.mulf %106, %107 : vector<8x128xf32>
    %c0_38 = arith.constant 0 : index
    %c0_39 = arith.constant 0 : index
    %109 = vector.load %arg8[%c0_38, %c0_39] : memref<16x8xf32, #tpu.memory_space<vmem>>, vector<16x8xf32>
    %cst_40 = arith.constant dense<0.000000e+00> : vector<16x128xf32>
    %110 = tpu.matmul %109, %108, %cst_40 {dimension_numbers = #tpu.dot_dimension_numbers<[1], [0], [0], [1], [0, 0, 1, 1], [], []>} : vector<16x8xf32>, vector<8x128xf32>, vector<16x128xf32> -> vector<16x128xf32>
    %111 = vector.broadcast %16 : vector<16x1xf32> to vector<16x128xf32>
    %112 = arith.addf %110, %111 : vector<16x128xf32>
    %113 = vector.extract_strided_slice %112 {offsets = [0, 0], sizes = [8, 128], strides = [1, 1]} : vector<16x128xf32> to vector<8x128xf32>
    %114 = vector.extract_strided_slice %112 {offsets = [8, 0], sizes = [8, 128], strides = [1, 1]} : vector<16x128xf32> to vector<8x128xf32>
    %115 = arith.addf %1, %113 : vector<8x128xf32>
    %cst_41 = arith.constant 0.707106769 : f32
    %116 = vector.broadcast %cst_41 : f32 to vector<8x128xf32>
    %117 = arith.mulf %115, %116 : vector<8x128xf32>
    %c0_42 = arith.constant 0 : index
    %c0_43 = arith.constant 0 : index
    %c0_44 = arith.constant 0 : index
    %118 = vector.load %arg10[%c0_42, %c0_43, %c0_44] : memref<1x8x128xf32, #tpu.memory_space<vmem>>, vector<1x8x128xf32>
    %119 = vector.shape_cast %118 : vector<1x8x128xf32> to vector<8x128xf32>
    %120 = vector.shape_cast %117 : vector<8x128xf32> to vector<1x8x128xf32>
    tpu.vector_store %arg10[%c0_42, %c0_43, %c0_44], %120 {strides = array<i32>} : memref<1x8x128xf32, #tpu.memory_space<vmem>>, vector<1x8x128xf32>,
    %c0_45 = arith.constant 0 : index
    %c0_46 = arith.constant 0 : index
    %c0_47 = arith.constant 0 : index
    %121 = vector.load %arg11[%c0_45, %c0_46, %c0_47] : memref<1x8x128xf32, #tpu.memory_space<vmem>>, vector<1x8x128xf32>
    %122 = vector.shape_cast %121 : vector<1x8x128xf32> to vector<8x128xf32>
    %123 = vector.shape_cast %114 : vector<8x128xf32> to vector<1x8x128xf32>
    tpu.vector_store %arg11[%c0_45, %c0_46, %c0_47], %123 {strides = array<i32>} : memref<1x8x128xf32, #tpu.memory_space<vmem>>, vector<1x8x128xf32>,
    return
  }
  func.func @transform_0(%arg0: i32) -> (i32, i32, i32) {
    %c0_i32 = arith.constant 0 : i32
    %c0_i32_0 = arith.constant 0 : i32
    %c0_i32_1 = arith.constant 0 : i32
    return %arg0, %c0_i32, %c0_i32_0 : i32, i32, i32
  }
  func.func @transform_1(%arg0: i32) -> (i32, i32, i32) {
    %c0_i32 = arith.constant 0 : i32
    %c0_i32_0 = arith.constant 0 : i32
    %c0_i32_1 = arith.constant 0 : i32
    return %arg0, %c0_i32, %c0_i32_0 : i32, i32, i32
  }
  func.func @transform_2(%arg0: i32) -> (i32, i32, i32) {
    %c0_i32 = arith.constant 0 : i32
    %c0_i32_0 = arith.constant 0 : i32
    %c0_i32_1 = arith.constant 0 : i32
    return %arg0, %c0_i32, %c0_i32_0 : i32, i32, i32
  }
  func.func @transform_3(%arg0: i32) -> (i32, i32, i32) {
    %c0_i32 = arith.constant 0 : i32
    %c0_i32_0 = arith.constant 0 : i32
    %c0_i32_1 = arith.constant 0 : i32
    return %arg0, %c0_i32, %c0_i32_0 : i32, i32, i32
  }
  func.func @transform_4(%arg0: i32) -> (i32, i32) {
    %c0_i32 = arith.constant 0 : i32
    %c0_i32_0 = arith.constant 0 : i32
    %c0_i32_1 = arith.constant 0 : i32
    return %c0_i32, %c0_i32_0 : i32, i32
  }
  func.func @transform_5(%arg0: i32) -> (i32, i32) {
    %c0_i32 = arith.constant 0 : i32
    %c0_i32_0 = arith.constant 0 : i32
    %c0_i32_1 = arith.constant 0 : i32
    return %c0_i32, %c0_i32_0 : i32, i32
  }
  func.func @transform_6(%arg0: i32) -> (i32, i32) {
    %c0_i32 = arith.constant 0 : i32
    %c0_i32_0 = arith.constant 0 : i32
    %c0_i32_1 = arith.constant 0 : i32
    return %c0_i32, %c0_i32_0 : i32, i32
  }
  func.func @transform_7(%arg0: i32) -> (i32, i32) {
    %c0_i32 = arith.constant 0 : i32
    %c0_i32_0 = arith.constant 0 : i32
    %c0_i32_1 = arith.constant 0 : i32
    return %c0_i32, %c0_i32_0 : i32, i32
  }
  func.func @transform_8(%arg0: i32) -> (i32, i32) {
    %c0_i32 = arith.constant 0 : i32
    %c0_i32_0 = arith.constant 0 : i32
    %c0_i32_1 = arith.constant 0 : i32
    return %c0_i32, %c0_i32_0 : i32, i32
  }
  func.func @transform_9(%arg0: i32) -> (i32, i32, i32) {
    %c0_i32 = arith.constant 0 : i32
    %c0_i32_0 = arith.constant 0 : i32
    %c0_i32_1 = arith.constant 0 : i32
    return %arg0, %c0_i32, %c0_i32_0 : i32, i32, i32
  }
  func.func @transform_10(%arg0: i32) -> (i32, i32, i32) {
    %c0_i32 = arith.constant 0 : i32
    %c0_i32_0 = arith.constant 0 : i32
    %c0_i32_1 = arith.constant 0 : i32
    return %arg0, %c0_i32, %c0_i32_0 : i32, i32, i32
  }
}

</mosaic_0001>

<llo_original>
// kernel: tpu_custom_call.1
$region0: #{tpu_custom_call.1}
  #allocation0 [shape = 'u32[]', space=smem, size = 0x4, offset = 0x4, fixed_abs, tag = 'smem constant byte address 0x4 - core index']
  #allocation1 [shape = 'u32[144,128]{1,0:T(1,128)}', space=vmem, size = 0x12000, scoped, tag = 'internal scratch']
  %s0 = inlined_call_operand.vmem [shape: f32[2,8,128], index: 0, kind: input, shape index: {}]
  %s1 = inlined_call_operand.vmem [shape: f32[2,8,128], index: 1, kind: input, shape index: {}]
  %s2 = inlined_call_operand.vmem [shape: f32[2,8,128], index: 2, kind: input, shape index: {}]
  %s3 = inlined_call_operand.vmem [shape: f32[2,8,1], index: 3, kind: input, shape index: {}]
  %s4 = inlined_call_operand.vmem [shape: f32[16,24], index: 4, kind: input, shape index: {}]
  %s5 = inlined_call_operand.vmem [shape: f32[16,24], index: 5, kind: input, shape index: {}]
  %s6 = inlined_call_operand.vmem [shape: f32[32,8], index: 6, kind: input, shape index: {}]
  %s7 = inlined_call_operand.vmem [shape: f32[16,8], index: 7, kind: input, shape index: {}]
  %s8 = inlined_call_operand.vmem [shape: f32[144,1], index: 8, kind: input, shape index: {}]
  %s9 = inlined_call_operand.hbm [shape: f32[2,8,128], index: 9, kind: output, shape index: {0}]
  %s10 = inlined_call_operand.hbm [shape: f32[2,8,128], index: 10, kind: output, shape index: {1}]
  %11 = xla_tuple %s9, %s10
  %s12 = sld [smem:[#allocation0]]
  $region77: #{tpu_custom_call.1} parent=0
    _
  %s14 = ssub.s32 1, %s12
  %s15 = scalar_select 0, %s14, %s12
  $region1: #{tpu_custom_call.1} parent=0
    #allocation2 [shape = 'u8[8192]{0}', space=vmem, size = 0x2000, scoped, tag = 'output window, operand 0']
    #allocation3 [shape = 's32[2]{0}', space=sflag, size = 0x8, scoped, tag = 'scoped memory for tpu_custom_call.1']
    #allocation4 [shape = 'u8[8192]{0}', space=vmem, size = 0x2000, scoped, tag = 'output window, operand 1']
    #allocation5 [shape = 's32[2]{0}', space=sflag, size = 0x8, scoped, tag = 'scoped memory for tpu_custom_call.1']
    %16 = vsyncpa [#allocation3], 0
    %s17 = scalar_lea.sflag [#allocation3], 1
    %18 = vsyncpa %s17, 0
    %19 = vsyncpa [#allocation5], 0
    %s20 = scalar_lea.sflag [#allocation5], 1
    %21 = vsyncpa %s20, 0
    loop: start=0, step=1, limit=4
    $region2: #{tpu_custom_call.1} parent=1 // loop_pre_header
      _
    $region3: #{tpu_custom_call.1} parent=1 // loop_header
      %s23 = sphi 0, %s27
      %p24 = scmp.ge.s32.totalorder %s23, 4
      %s33 = sphi 0, %s35
      %s36 = sphi 0, %s33
      %s37 = sphi 0, %s36
      %s53 = sphi 0, %s37
      %s59 = sphi 0, %s61
      %s62 = sphi 0, %s59
      %s63 = sphi 0, %s62
      %s79 = sphi 0, %s63
      %s85 = sphi 0, %s87
      %s88 = sphi 0, %s85
      %s89 = sphi 0, %s88
      %s105 = sphi 0, %s89
      %s111 = sphi 0, %s113
      %s114 = sphi 0, %s111
      %s115 = sphi 0, %s114
      %s131 = sphi 0, %s115
      %s135 = sphi 0, %s135
      %s137 = sphi 0, %s135
      %s138 = sphi 0, %s137
      %s152 = sphi 0, %s138
      %s156 = sphi 0, %s156
      %s158 = sphi 0, %s156
      %s159 = sphi 0, %s158
      %s173 = sphi 0, %s159
      %s177 = sphi 0, %s177
      %s179 = sphi 0, %s177
      %s180 = sphi 0, %s179
      %s194 = sphi 0, %s180
      %s198 = sphi 0, %s198
      %s200 = sphi 0, %s198
      %s201 = sphi 0, %s200
      %s215 = sphi 0, %s201
      %s219 = sphi 0, %s219
      %s221 = sphi 0, %s219
      %s222 = sphi 0, %s221
      %s236 = sphi 0, %s222
      %s242 = sphi 0, %s244
      %s245 = sphi 0, %s242
      %s246 = sphi 0, %s245
      %s262 = sphi 0, %s246
      %s268 = sphi 0, %s270
      %s271 = sphi 0, %s268
      %s272 = sphi 0, %s271
      %s288 = sphi 0, %s272
    $region4: #{tpu_custom_call.1} parent=1 // loop_header_branch
      %26 = sbr.rel (%p24) target = $region8
    $region5: #{tpu_custom_call.1} parent=1 // loop_body
      %s28 = ssub.s32 %s23, 1
      %s29 = ssub.s32 %s23, 2
      %s30 = sadd.s32 %s23, 1
      %s31 = ssub.s32 %s23, %s30
      %p32 = scmp.eq.s32.totalorder %s31, 0
      %s34 = sadd.s32 %s33, 1
      %s35 = scalar_select %p32, %s33, %s34
      %p38 = pneg %p32
      %p39 = scmp.eq.s32.totalorder %s23, 1
      %p40 = por %p38, %p39
      %p41 = scmp.ne.s32.totalorder %s33, %s36
      %p42 = scmp.eq.s32.totalorder %s23, 0
      %p43 = por %p41, %p42
      %p44 = scmp.ne.s32.totalorder %s33, %s36
      %p45 = scmp.eq.s32.totalorder %s28, 1
      %p46 = por %p44, %p45
      %p47 = scmp.ne.s32.totalorder %s36, %s37
      %p48 = scmp.eq.s32.totalorder %s28, 0
      %p49 = por %p47, %p48
      %p50 = scmp.ne.s32.totalorder %s36, %s37
      %p51 = scmp.eq.s32.totalorder %s29, 1
      %p52 = por %p50, %p51
      %p54 = scmp.ne.s32.totalorder %s37, %s53
      %p55 = scmp.eq.s32.totalorder %s29, 0
      %p56 = por %p54, %p55
      %s57 = ssub.s32 %s23, %s30
      %p58 = scmp.eq.s32.totalorder %s57, 0
      %s60 = sadd.s32 %s59, 1
      %s61 = scalar_select %p58, %s59, %s60
      %p64 = pneg %p58
      %p65 = scmp.eq.s32.totalorder %s23, 1
      %p66 = por %p64, %p65
      %p67 = scmp.ne.s32.totalorder %s59, %s62
      %p68 = scmp.eq.s32.totalorder %s23, 0
      %p69 = por %p67, %p68
      %p70 = scmp.ne.s32.totalorder %s59, %s62
      %p71 = scmp.eq.s32.totalorder %s28, 1
      %p72 = por %p70, %p71
      %p73 = scmp.ne.s32.totalorder %s62, %s63
      %p74 = scmp.eq.s32.totalorder %s28, 0
      %p75 = por %p73, %p74
      %p76 = scmp.ne.s32.totalorder %s62, %s63
      %p77 = scmp.eq.s32.totalorder %s29, 1
      %p78 = por %p76, %p77
      %p80 = scmp.ne.s32.totalorder %s63, %s79
      %p81 = scmp.eq.s32.totalorder %s29, 0
      %p82 = por %p80, %p81
      %s83 = ssub.s32 %s23, %s30
      %p84 = scmp.eq.s32.totalorder %s83, 0
      %s86 = sadd.s32 %s85, 1
      %s87 = scalar_select %p84, %s85, %s86
      %p90 = pneg %p84
      %p91 = scmp.eq.s32.totalorder %s23, 1
      %p92 = por %p90, %p91
      %p93 = scmp.ne.s32.totalorder %s85, %s88
      %p94 = scmp.eq.s32.totalorder %s23, 0
      %p95 = por %p93, %p94
      %p96 = scmp.ne.s32.totalorder %s85, %s88
      %p97 = scmp.eq.s32.totalorder %s28, 1
      %p98 = por %p96, %p97
      %p99 = scmp.ne.s32.totalorder %s88, %s89
      %p100 = scmp.eq.s32.totalorder %s28, 0
      %p101 = por %p99, %p100
      %p102 = scmp.ne.s32.totalorder %s88, %s89
      %p103 = scmp.eq.s32.totalorder %s29, 1
      %p104 = por %p102, %p103
      %p106 = scmp.ne.s32.totalorder %s89, %s105
      %p107 = scmp.eq.s32.totalorder %s29, 0
      %p108 = por %p106, %p107
      %s109 = ssub.s32 %s23, %s30
      %p110 = scmp.eq.s32.totalorder %s109, 0
      %s112 = sadd.s32 %s111, 1
      %s113 = scalar_select %p110, %s111, %s112
      %p116 = pneg %p110
      %p117 = scmp.eq.s32.totalorder %s23, 1
      %p118 = por %p116, %p117
      %p119 = scmp.ne.s32.totalorder %s111, %s114
      %p120 = scmp.eq.s32.totalorder %s23, 0
      %p121 = por %p119, %p120
      %p122 = scmp.ne.s32.totalorder %s111, %s114
      %p123 = scmp.eq.s32.totalorder %s28, 1
      %p124 = por %p122, %p123
      %p125 = scmp.ne.s32.totalorder %s114, %s115
      %p126 = scmp.eq.s32.totalorder %s28, 0
      %p127 = por %p125, %p126
      %p128 = scmp.ne.s32.totalorder %s114, %s115
      %p129 = scmp.eq.s32.totalorder %s29, 1
      %p130 = por %p128, %p129
      %p132 = scmp.ne.s32.totalorder %s115, %s131
      %p133 = scmp.eq.s32.totalorder %s29, 0
      %p134 = por %p132, %p133
      %s136 = sadd.s32 %s135, 1
      %p139 = scmp.eq.s32.totalorder %s23, 1
      %p140 = scmp.ne.s32.totalorder %s135, %s137
      %p141 = scmp.eq.s32.totalorder %s23, 0
      %p142 = por %p140, %p141
      %p143 = scmp.ne.s32.totalorder %s135, %s137
      %p144 = scmp.eq.s32.totalorder %s28, 1
      %p145 = por %p143, %p144
      %p146 = scmp.ne.s32.totalorder %s137, %s138
      %p147 = scmp.eq.s32.totalorder %s28, 0
      %p148 = por %p146, %p147
      %p149 = scmp.ne.s32.totalorder %s137, %s138
      %p150 = scmp.eq.s32.totalorder %s29, 1
      %p151 = por %p149, %p150
      %p153 = scmp.ne.s32.totalorder %s138, %s152
      %p154 = scmp.eq.s32.totalorder %s29, 0
      %p155 = por %p153, %p154
      %s157 = sadd.s32 %s156, 1
      %p160 = scmp.eq.s32.totalorder %s23, 1
      %p161 = scmp.ne.s32.totalorder %s156, %s158
      %p162 = scmp.eq.s32.totalorder %s23, 0
      %p163 = por %p161, %p162
      %p164 = scmp.ne.s32.totalorder %s156, %s158
      %p165 = scmp.eq.s32.totalorder %s28, 1
      %p166 = por %p164, %p165
      %p167 = scmp.ne.s32.totalorder %s158, %s159
      %p168 = scmp.eq.s32.totalorder %s28, 0
      %p169 = por %p167, %p168
      %p170 = scmp.ne.s32.totalorder %s158, %s159
      %p171 = scmp.eq.s32.totalorder %s29, 1
      %p172 = por %p170, %p171
      %p174 = scmp.ne.s32.totalorder %s159, %s173
      %p175 = scmp.eq.s32.totalorder %s29, 0
      %p176 = por %p174, %p175
      %s178 = sadd.s32 %s177, 1
      %p181 = scmp.eq.s32.totalorder %s23, 1
      %p182 = scmp.ne.s32.totalorder %s177, %s179
      %p183 = scmp.eq.s32.totalorder %s23, 0
      %p184 = por %p182, %p183
      %p185 = scmp.ne.s32.totalorder %s177, %s179
      %p186 = scmp.eq.s32.totalorder %s28, 1
      %p187 = por %p185, %p186
      %p188 = scmp.ne.s32.totalorder %s179, %s180
      %p189 = scmp.eq.s32.totalorder %s28, 0
      %p190 = por %p188, %p189
      %p191 = scmp.ne.s32.totalorder %s179, %s180
      %p192 = scmp.eq.s32.totalorder %s29, 1
      %p193 = por %p191, %p192
      %p195 = scmp.ne.s32.totalorder %s180, %s194
      %p196 = scmp.eq.s32.totalorder %s29, 0
      %p197 = por %p195, %p196
      %s199 = sadd.s32 %s198, 1
      %p202 = scmp.eq.s32.totalorder %s23, 1
      %p203 = scmp.ne.s32.totalorder %s198, %s200
      %p204 = scmp.eq.s32.totalorder %s23, 0
      %p205 = por %p203, %p204
      %p206 = scmp.ne.s32.totalorder %s198, %s200
      %p207 = scmp.eq.s32.totalorder %s28, 1
      %p208 = por %p206, %p207
      %p209 = scmp.ne.s32.totalorder %s200, %s201
      %p210 = scmp.eq.s32.totalorder %s28, 0
      %p211 = por %p209, %p210
      %p212 = scmp.ne.s32.totalorder %s200, %s201
      %p213 = scmp.eq.s32.totalorder %s29, 1
      %p214 = por %p212, %p213
      %p216 = scmp.ne.s32.totalorder %s201, %s215
      %p217 = scmp.eq.s32.totalorder %s29, 0
      %p218 = por %p216, %p217
      %s220 = sadd.s32 %s219, 1
      %p223 = scmp.eq.s32.totalorder %s23, 1
      %p224 = scmp.ne.s32.totalorder %s219, %s221
      %p225 = scmp.eq.s32.totalorder %s23, 0
      %p226 = por %p224, %p225
      %p227 = scmp.ne.s32.totalorder %s219, %s221
      %p228 = scmp.eq.s32.totalorder %s28, 1
      %p229 = por %p227, %p228
      %p230 = scmp.ne.s32.totalorder %s221, %s222
      %p231 = scmp.eq.s32.totalorder %s28, 0
      %p232 = por %p230, %p231
      %p233 = scmp.ne.s32.totalorder %s221, %s222
      %p234 = scmp.eq.s32.totalorder %s29, 1
      %p235 = por %p233, %p234
      %p237 = scmp.ne.s32.totalorder %s222, %s236
      %p238 = scmp.eq.s32.totalorder %s29, 0
      %p239 = por %p237, %p238
      %s240 = ssub.s32 %s23, %s30
      %p241 = scmp.eq.s32.totalorder %s240, 0
      %s243 = sadd.s32 %s242, 1
      %s244 = scalar_select %p241, %s242, %s243
      %p247 = pneg %p241
      %p248 = scmp.eq.s32.totalorder %s23, 1
      %p249 = por %p247, %p248
      %p250 = scmp.ne.s32.totalorder %s242, %s245
      %p251 = scmp.eq.s32.totalorder %s23, 0
      %p252 = por %p250, %p251
      %p253 = scmp.ne.s32.totalorder %s242, %s245
      %p254 = scmp.eq.s32.totalorder %s28, 1
      %p255 = por %p253, %p254
      %p256 = scmp.ne.s32.totalorder %s245, %s246
      %p257 = scmp.eq.s32.totalorder %s28, 0
      %p258 = por %p256, %p257
      %p259 = scmp.ne.s32.totalorder %s245, %s246
      %p260 = scmp.eq.s32.totalorder %s29, 1
      %p261 = por %p259, %p260
      %p263 = scmp.ne.s32.totalorder %s246, %s262
      %p264 = scmp.eq.s32.totalorder %s29, 0
      %p265 = por %p263, %p264
      %s266 = ssub.s32 %s23, %s30
      %p267 = scmp.eq.s32.totalorder %s266, 0
      %s269 = sadd.s32 %s268, 1
      %s270 = scalar_select %p267, %s268, %s269
      %p273 = pneg %p267
      %p274 = scmp.eq.s32.totalorder %s23, 1
      %p275 = por %p273, %p274
      %p276 = scmp.ne.s32.totalorder %s268, %s271
      %p277 = scmp.eq.s32.totalorder %s23, 0
      %p278 = por %p276, %p277
      %p279 = scmp.ne.s32.totalorder %s268, %s271
      %p280 = scmp.eq.s32.totalorder %s28, 1
      %p281 = por %p279, %p280
      %p282 = scmp.ne.s32.totalorder %s271, %s272
      %p283 = scmp.eq.s32.totalorder %s28, 0
      %p284 = por %p282, %p283
      %p285 = scmp.ne.s32.totalorder %s271, %s272
      %p286 = scmp.eq.s32.totalorder %s29, 1
      %p287 = por %p285, %p286
      %p289 = scmp.ne.s32.totalorder %s272, %s288
      %p290 = scmp.eq.s32.totalorder %s29, 0
      %p291 = por %p289, %p290
      %p292 = scmp.le.s32.totalorder 1, %s23
      %p293 = scmp.lt.s32.totalorder %s23, 3
      %p294 = pnand %p292, %p293
      %p295 = pneg %p294
      // Predicated region
      $region9: #{tpu_custom_call.1} parent=5 // pred_check
        _
      $region10: #{tpu_custom_call.1} parent=5 // pred_check_branch
        %297 = sbr.rel (%p294) target = $region12
      $region11: #{tpu_custom_call.1} parent=5 // pred_region
        %s298 = ssub.s32 %s23, 1
        // Predicated region
        $region13: #{tpu_custom_call.1} parent=11 // pred_check
          %p299 = pneg %p148
        $region14: #{tpu_custom_call.1} parent=11 // pred_check_branch
          %301 = sbr.rel (%p299) target = $region16
        $region15: #{tpu_custom_call.1} parent=11 // pred_region
          _
        $region16: #{tpu_custom_call.1} parent=11 // pred_fallthru
          _
        // Predicated region
        $region17: #{tpu_custom_call.1} parent=11 // pred_check
          %p302 = pneg %p169
        $region18: #{tpu_custom_call.1} parent=11 // pred_check_branch
          %304 = sbr.rel (%p302) target = $region20
        $region19: #{tpu_custom_call.1} parent=11 // pred_region
          _
        $region20: #{tpu_custom_call.1} parent=11 // pred_fallthru
          _
        // Predicated region
        $region21: #{tpu_custom_call.1} parent=11 // pred_check
          %p305 = pneg %p190
        $region22: #{tpu_custom_call.1} parent=11 // pred_check_branch
          %307 = sbr.rel (%p305) target = $region24
        $region23: #{tpu_custom_call.1} parent=11 // pred_region
          _
        $region24: #{tpu_custom_call.1} parent=11 // pred_fallthru
          _
        // Predicated region
        $region25: #{tpu_custom_call.1} parent=11 // pred_check
          %p308 = pneg %p211
        $region26: #{tpu_custom_call.1} parent=11 // pred_check_branch
          %310 = sbr.rel (%p308) target = $region28
        $region27: #{tpu_custom_call.1} parent=11 // pred_region
          _
        $region28: #{tpu_custom_call.1} parent=11 // pred_fallthru
          _
        // Predicated region
        $region29: #{tpu_custom_call.1} parent=11 // pred_check
          %p311 = pneg %p232
        $region30: #{tpu_custom_call.1} parent=11 // pred_check_branch
          %313 = sbr.rel (%p311) target = $region32
        $region31: #{tpu_custom_call.1} parent=11 // pred_region
          _
        $region32: #{tpu_custom_call.1} parent=11 // pred_fallthru
          _
      $region12: #{tpu_custom_call.1} parent=5 // pred_fallthru
        _
      %p314 = scmp.lt.s32.totalorder %s23, 2
      // Predicated region
      $region33: #{tpu_custom_call.1} parent=5 // pred_check
        %p315 = pneg %p314
      $region34: #{tpu_custom_call.1} parent=5 // pred_check_branch
        %317 = sbr.rel (%p315) target = $region36
      $region35: #{tpu_custom_call.1} parent=5 // pred_region
        // Predicated region
        $region37: #{tpu_custom_call.1} parent=35 // pred_check
          %p318 = pneg %p43
        $region38: #{tpu_custom_call.1} parent=35 // pred_check_branch
          %320 = sbr.rel (%p318) target = $region40
        $region39: #{tpu_custom_call.1} parent=35 // pred_region
          %p321 = scmp.lt.s32.totalorder %s23, 1
          %s322 = scalar_select %p321, %s23, 1
          %s323 = smul.addr %s322, 8
          %s324 = scalar_lea.vmem %s0, %s323
        $region40: #{tpu_custom_call.1} parent=35 // pred_fallthru
          _
        // Predicated region
        $region41: #{tpu_custom_call.1} parent=35 // pred_check
          %p325 = pneg %p69
        $region42: #{tpu_custom_call.1} parent=35 // pred_check_branch
          %327 = sbr.rel (%p325) target = $region44
        $region43: #{tpu_custom_call.1} parent=35 // pred_region
          %p328 = scmp.lt.s32.totalorder %s23, 1
          %s329 = scalar_select %p328, %s23, 1
          %s330 = smul.addr %s329, 8
          %s331 = scalar_lea.vmem %s1, %s330
        $region44: #{tpu_custom_call.1} parent=35 // pred_fallthru
          _
        // Predicated region
        $region45: #{tpu_custom_call.1} parent=35 // pred_check
          %p332 = pneg %p95
        $region46: #{tpu_custom_call.1} parent=35 // pred_check_branch
          %334 = sbr.rel (%p332) target = $region48
        $region47: #{tpu_custom_call.1} parent=35 // pred_region
          %p335 = scmp.lt.s32.totalorder %s23, 1
          %s336 = scalar_select %p335, %s23, 1
          %s337 = smul.addr %s336, 8
          %s338 = scalar_lea.vmem %s2, %s337
        $region48: #{tpu_custom_call.1} parent=35 // pred_fallthru
          _
        // Predicated region
        $region49: #{tpu_custom_call.1} parent=35 // pred_check
          %p339 = pneg %p121
        $region50: #{tpu_custom_call.1} parent=35 // pred_check_branch
          %341 = sbr.rel (%p339) target = $region52
        $region51: #{tpu_custom_call.1} parent=35 // pred_region
          %p342 = scmp.lt.s32.totalorder %s23, 1
          %s343 = scalar_select %p342, %s23, 1
          %s344 = smul.addr %s343, 8
          %s345 = scalar_lea.vmem %s3, %s344
        $region52: #{tpu_custom_call.1} parent=35 // pred_fallthru
          _
      $region36: #{tpu_custom_call.1} parent=5 // pred_fallthru
        _
      %p346 = scmp.le.s32.totalorder 1, %s23
      %p347 = scmp.lt.s32.totalorder %s23, 3
      %p348 = pnand %p346, %p347
      %p349 = pneg %p348
      // Predicated region
      $region53: #{tpu_custom_call.1} parent=5 // pred_check
        _
      $region54: #{tpu_custom_call.1} parent=5 // pred_check_branch
        %351 = sbr.rel (%p348) target = $region56
      $region55: #{tpu_custom_call.1} parent=5 // pred_region
        %s352 = ssub.s32 %s23, 1
        %p353 = scmp.lt.s32.totalorder %s28, 1
        %s354 = scalar_select %p353, %s28, 1
        %s355 = smul.addr %s354, 8
        %s356 = scalar_lea.vmem %s0, %s355
        %p357 = pneg %p49
        %p358 = pneg %p46
        %p359 = scmp.lt.s32.totalorder %s28, 1
        %s360 = scalar_select %p359, %s28, 1
        %s361 = smul.addr %s360, 8
        %s362 = scalar_lea.vmem %s1, %s361
        %p363 = pneg %p75
        %p364 = pneg %p72
        %p365 = scmp.lt.s32.totalorder %s28, 1
        %s366 = scalar_select %p365, %s28, 1
        %s367 = smul.addr %s366, 8
        %s368 = scalar_lea.vmem %s2, %s367
        %p369 = pneg %p101
        %p370 = pneg %p98
        %p371 = scmp.lt.s32.totalorder %s28, 1
        %s372 = scalar_select %p371, %s28, 1
        %s373 = smul.addr %s372, 8
        %s374 = scalar_lea.vmem %s3, %s373
        %p375 = pneg %p127
        %p376 = pneg %p124
        %p377 = pneg %p148
        %p378 = pneg %p145
        %p379 = pneg %p169
        %p380 = pneg %p166
        %p381 = pneg %p190
        %p382 = pneg %p187
        %p383 = pneg %p211
        %p384 = pneg %p208
        %p385 = pneg %p232
        %p386 = pneg %p229
        %p387 = pneg %p258
        %p388 = pneg %p255
        %s389 = sand.u32 %s245, 1
        %s390 = scalar_lea.sflag [#allocation3], %s389
        %s391 = sand.u32 %s245, 1
        %s392 = smul.addr %s391, 8
        %s393 = scalar_lea.vmem [#allocation2], %s392
        %p394 = pneg %p284
        %p395 = pneg %p281
        %s396 = sand.u32 %s271, 1
        %s397 = scalar_lea.sflag [#allocation5], %s396
        %s398 = sand.u32 %s271, 1
        %s399 = smul.addr %s398, 8
        %s400 = scalar_lea.vmem [#allocation4], %s399
        %p401 = scmp.lt.s32.totalorder %s28, 1
        %s402 = scalar_select %p401, %s28, 1
        %s403 = smul.addr %s402, 8
        %s404 = scalar_lea.vmem %s0, %s403
        %p405 = scmp.lt.s32.totalorder %s28, 1
        %s406 = scalar_select %p405, %s28, 1
        %s407 = smul.addr %s406, 8
        %s408 = scalar_lea.vmem %s1, %s407
        %p409 = scmp.lt.s32.totalorder %s28, 1
        %s410 = scalar_select %p409, %s28, 1
        %s411 = smul.addr %s410, 8
        %s412 = scalar_lea.vmem %s2, %s411
        %p413 = scmp.lt.s32.totalorder %s28, 1
        %s414 = scalar_select %p413, %s28, 1
        %s415 = smul.addr %s414, 8
        %s416 = scalar_lea.vmem %s3, %s415
        %v417 = vld [vmem:[%s404] sm:$0xff]
        %v418 = vld [vmem:[%s408] sm:$0xff]
        %v419 = vld [vmem:[%s412] sm:$0xff]
        %v420 = vld [vmem:[%s416] sm:$0xff]
        %v421 = vld [vmem:[%s8] sm:$0xff]
        %v422 = vld [vmem:[%s8 + $0x8] sm:$0xff]
        %v423 = vld [vmem:[%s8 + $0x10] sm:$0xff]
        %v424 = vld [vmem:[%s8 + $0x18] sm:$0xff]
        %v425 = vld [vmem:[%s8 + $0x20] sm:$0xff]
        %v426 = vld [vmem:[%s8 + $0x28] sm:$0xff]
        %v427 = vld [vmem:[%s8 + $0x30] sm:$0xff]
        %v428 = vld [vmem:[%s8 + $0x38] sm:$0xff]
        %v429 = vld [vmem:[%s8 + $0x40] sm:$0xff]
        %v430 = vld [vmem:[%s8 + $0x48] sm:$0xff]
        %v431 = vld [vmem:[%s8 + $0x50] sm:$0xff]
        %v432 = vld [vmem:[%s8 + $0x58] sm:$0xff]
        %v433 = vld [vmem:[%s8 + $0x60] sm:$0xff]
        %v434 = vld [vmem:[%s8 + $0x68] sm:$0xff]
        %v435 = vld [vmem:[%s8 + $0x70] sm:$0xff]
        %v436 = vld [vmem:[%s8 + $0x78] sm:$0xff]
        %v437 = vld [vmem:[%s8 + $0x80] sm:$0xff]
        %v438 = vld [vmem:[%s8 + $0x88] sm:$0xff]
        %440 = vset.pattern.permute.xlu0 0
        %441 = vperm.xlu0 %440, %v420
        %v442 = vpop.permute.xlu0 %441
        %v444 = vadd.f32 %v417, %v442
        %v445 = vlaneseq
        %v446 = vand.u32 %v445, 127
        %vm447 = vcmp.ge.s32.totalorder %v446, 2
        %448 = vrot.lane.b32.xlu0 %v444, 2
        %v449 = vpop.permute.xlu0 %448
        %v450 = vsel %vm447, %v449, 0.0
        %vm451 = vcmp.lt.s32.totalorder %v446, 126
        %452 = vrot.lane.b32.xlu0 %v444, 126
        %v453 = vpop.permute.xlu0 %452
        %v454 = vsel %vm451, %v453, 0.0
        %v455 = vld [vmem:[%s4] sm:$0xff]
        %v456 = vld [vmem:[%s4 + $0x8] sm:$0xff]
        %458 = vset.pattern.permute.xlu0 0
        %459 = vperm.xlu0 %458, %v421
        %v460 = vpop.permute.xlu0 %459
        %463 = vset.pattern.permute.xlu0 0
        %464 = vperm.xlu0 %463, %v422
        %v465 = vpop.permute.xlu0 %464
        %vm467 = vcmask 195584
        %v469 = vsel %vm467, %v455, 0
        %v472 = vsel %vm467, %v456, 0
        %474 = vmatprep.subr.mxu0 0.0
        %475 = vmatpush1.msra.mxu0 %v450
        %476 = vmatprep.subr.mxu0 0.0
        %477 = vmatpush1.msra.mxu0 %v444
        %478 = vmatprep.subr.mxu0 0.0
        %479 = vmatpush1.msra.mxu0 %v454
        %480 = vmatprep.subr.mxu0 0.0
        %481 = vmatpush1.msra.mxu0 0.0
        %482 = vmatprep.subr.mxu0 0.0
        %483 = vmatpush1.msra.mxu0 0.0
        %484 = vmatprep.subr.mxu0 0.0
        %485 = vmatpush1.msra.mxu0 0.0
        %486 = vmatprep.subr.mxu0 0.0
        %487 = vmatpush1.msra.mxu0 0.0
        %488 = vmatprep.subr.mxu0 0.0
        %489 = vmatpush1.msra.mxu0 0.0
        %490 = vmatprep.subr.mxu0 0.0
        %491 = vmatpush1.msra.mxu0 0.0
        %492 = vmatprep.subr.mxu0 0.0
        %493 = vmatpush1.msra.mxu0 0.0
        %494 = vmatprep.subr.mxu0 0.0
        %495 = vmatpush1.msra.mxu0 0.0
        %496 = vmatprep.subr.mxu0 0.0
        %497 = vmatpush1.msra.mxu0 0.0
        %498 = vmatprep.subr.mxu0 0.0
        %499 = vmatpush1.msra.mxu0 0.0
        %500 = vmatprep.subr.mxu0 0.0
        %501 = vmatpush1.msra.mxu0 0.0
        %502 = vmatprep.subr.mxu0 0.0
        %503 = vmatpush1.msra.mxu0 0.0
        %504 = vmatprep.subr.mxu0 0.0
        %505 = vmatpush1.msra.mxu0 0.0
        %506 = vmatprep.subr.mxu0 0.0
        %507 = vmatpush1.msra.mxu0 0.0
        %508 = vmatprep.subr.mxu0 0.0
        %509 = vmatpush1.msra.mxu0 0.0
        %510 = vmatprep.subr.mxu0 0.0
        %511 = vmatpush1.msra.mxu0 0.0
        %512 = vmatprep.subr.mxu0 0.0
        %513 = vmatpush1.msra.mxu0 0.0
        %514 = vmatprep.subr.mxu0 0.0
        %515 = vmatpush1.msra.mxu0 0.0
        %516 = vmatprep.subr.mxu0 0.0
        %517 = vmatpush1.msra.mxu0 0.0
        %518 = vmatprep.subr.mxu0 0.0
        %519 = vmatpush1.msra.mxu0 0.0
        %520 = vmatprep.subr.mxu0 0.0
        %521 = vmatpush1.msra.mxu0 0.0
        %522 = vmatprep.subr.mxu0 0.0
        %523 = vmatpush1.msra.mxu0 0.0
        %524 = vmatprep.subr.mxu0 0.0
        %525 = vmatpush1.msra.mxu0 0.0
        %526 = vmatprep.subr.mxu0 0.0
        %527 = vmatpush1.msra.mxu0 0.0
        %528 = vmatprep.subr.mxu0 0.0
        %529 = vmatpush1.msra.mxu0 0.0
        %530 = vmatprep.subr.mxu0 0.0
        %531 = vmatpush1.msra.mxu0 0.0
        %532 = vmatprep.subr.mxu0 0.0
        %533 = vmatpush1.msra.mxu0 0.0
        %534 = vmatprep.subr.mxu0 0.0
        %535 = vmatpush1.msra.mxu0 0.0
        %536 = vmatprep.subr.mxu0 0.0
        %537 = vmatpush1.msra.mxu0 0.0
        %538 = vmatprep.mubr.f32.mxu0 0.0
        %539 = vmatmul.mubr.f32.gmra.mrb[0].mxu0 %v469
        %v540 = vpop.f32.mrb[0].mxu0
        %v541 = vadd.f32 %v460, %v540
        %v542 = vpop.f32.mrb[0].mxu0
        %543 = vmatprep.mubr.f32.mxu0 0.0
        %544 = vmatmul.mubr.f32.gmra.mrb[0].mxu0 %v472
        %v545 = vpop.f32.mrb[0].mxu0
        %v546 = vadd.f32 %v465, %v545
        %v547 = vpop.f32.mrb[0].mxu0
        %548 = vdwg.mxu0
        %549 = vadd.xlane.f32.xlu0 %v541
        %v550 = vpop.xlane.xlu0 %549
        %551 = vadd.xlane.f32.xlu0 %v546
        %v552 = vpop.xlane.xlu0 %551
        %v553 = vrcp.pop 128.0
        %v554 = vmul.f32 %v550, %v553
        %v555 = vmul.f32 %v552, %v553
        %v556 = vsub.f32 %v541, %v554
        %v557 = vsub.f32 %v546, %v555
        %v558 = vmul.f32 %v556, %v556
        %v559 = vmul.f32 %v557, %v557
        %560 = vadd.xlane.f32.xlu0 %v558
        %v561 = vpop.xlane.xlu0 %560
        %562 = vadd.xlane.f32.xlu0 %v559
        %v563 = vpop.xlane.xlu0 %562
        %v564 = vmul.f32 %v561, %v553
        %v565 = vmul.f32 %v563, %v553
        %v566 = vadd.f32 %v564, 1e-05
        %v567 = vadd.f32 %v565, 1e-05
        %v568 = vrsqrt.pop %v566
        %v569 = vrsqrt.pop %v567
        %v570 = vmul.f32 %v556, %v568
        %v571 = vmul.f32 %v557, %v569
        %573 = vset.pattern.permute.xlu0 0
        %574 = vperm.xlu0 %573, %v423
        %v575 = vpop.permute.xlu0 %574
        %578 = vset.pattern.permute.xlu0 0
        %579 = vperm.xlu0 %578, %v424
        %v580 = vpop.permute.xlu0 %579
        %v582 = vmul.f32 %v570, %v575
        %v583 = vmul.f32 %v571, %v580
        %585 = vset.pattern.permute.xlu0 0
        %586 = vperm.xlu0 %585, %v425
        %v587 = vpop.permute.xlu0 %586
        %590 = vset.pattern.permute.xlu0 0
        %591 = vperm.xlu0 %590, %v426
        %v592 = vpop.permute.xlu0 %591
        %v594 = vadd.f32 %v582, %v587
        %v595 = vadd.f32 %v583, %v592
        %v596 = vld [vmem:[%s5] sm:$0xff]
        %v597 = vld [vmem:[%s5 + $0x8] sm:$0xff]
        %599 = vset.pattern.permute.xlu0 0
        %600 = vperm.xlu0 %599, %v427
        %v601 = vpop.permute.xlu0 %600
        %604 = vset.pattern.permute.xlu0 0
        %605 = vperm.xlu0 %604, %v428
        %v606 = vpop.permute.xlu0 %605
        %v609 = vsel %vm467, %v596, 0
        %v612 = vsel %vm467, %v597, 0
        %614 = vmatprep.subr.mxu0 0.0
        %615 = vmatpush1.msra.mxu0 %v594
        %616 = vmatprep.subr.mxu0 0.0
        %617 = vmatpush1.msra.mxu0 %v595
        %618 = vmatprep.subr.mxu0 0.0
        %619 = vmatpush1.msra.mxu0 %v419
        %620 = vmatprep.subr.mxu0 0.0
        %621 = vmatpush1.msra.mxu0 0.0
        %622 = vmatprep.subr.mxu0 0.0
        %623 = vmatpush1.msra.mxu0 0.0
        %624 = vmatprep.subr.mxu0 0.0
        %625 = vmatpush1.msra.mxu0 0.0
        %626 = vmatprep.subr.mxu0 0.0
        %627 = vmatpush1.msra.mxu0 0.0
        %628 = vmatprep.subr.mxu0 0.0
        %629 = vmatpush1.msra.mxu0 0.0
        %630 = vmatprep.subr.mxu0 0.0
        %631 = vmatpush1.msra.mxu0 0.0
        %632 = vmatprep.subr.mxu0 0.0
        %633 = vmatpush1.msra.mxu0 0.0
        %634 = vmatprep.subr.mxu0 0.0
        %635 = vmatpush1.msra.mxu0 0.0
        %636 = vmatprep.subr.mxu0 0.0
        %637 = vmatpush1.msra.mxu0 0.0
        %638 = vmatprep.subr.mxu0 0.0
        %639 = vmatpush1.msra.mxu0 0.0
        %640 = vmatprep.subr.mxu0 0.0
        %641 = vmatpush1.msra.mxu0 0.0
        %642 = vmatprep.subr.mxu0 0.0
        %643 = vmatpush1.msra.mxu0 0.0
        %644 = vmatprep.subr.mxu0 0.0
        %645 = vmatpush1.msra.mxu0 0.0
        %646 = vmatprep.subr.mxu0 0.0
        %647 = vmatpush1.msra.mxu0 0.0
        %648 = vmatprep.subr.mxu0 0.0
        %649 = vmatpush1.msra.mxu0 0.0
        %650 = vmatprep.subr.mxu0 0.0
        %651 = vmatpush1.msra.mxu0 0.0
        %652 = vmatprep.subr.mxu0 0.0
        %653 = vmatpush1.msra.mxu0 0.0
        %654 = vmatprep.subr.mxu0 0.0
        %655 = vmatpush1.msra.mxu0 0.0
        %656 = vmatprep.subr.mxu0 0.0
        %657 = vmatpush1.msra.mxu0 0.0
        %658 = vmatprep.subr.mxu0 0.0
        %659 = vmatpush1.msra.mxu0 0.0
        %660 = vmatprep.subr.mxu0 0.0
        %661 = vmatpush1.msra.mxu0 0.0
        %662 = vmatprep.subr.mxu0 0.0
        %663 = vmatpush1.msra.mxu0 0.0
        %664 = vmatprep.subr.mxu0 0.0
        %665 = vmatpush1.msra.mxu0 0.0
        %666 = vmatprep.subr.mxu0 0.0
        %667 = vmatpush1.msra.mxu0 0.0
        %668 = vmatprep.subr.mxu0 0.0
        %669 = vmatpush1.msra.mxu0 0.0
        %670 = vmatprep.subr.mxu0 0.0
        %671 = vmatpush1.msra.mxu0 0.0
        %672 = vmatprep.subr.mxu0 0.0
        %673 = vmatpush1.msra.mxu0 0.0
        %674 = vmatprep.subr.mxu0 0.0
        %675 = vmatpush1.msra.mxu0 0.0
        %676 = vmatprep.subr.mxu0 0.0
        %677 = vmatpush1.msra.mxu0 0.0
        %678 = vmatprep.mubr.f32.mxu0 0.0
        %679 = vmatmul.mubr.f32.gmra.mrb[0].mxu0 %v609
        %v680 = vpop.f32.mrb[0].mxu0
        %v681 = vadd.f32 %v601, %v680
        %v682 = vpop.f32.mrb[0].mxu0
        %683 = vmatprep.mubr.f32.mxu0 0.0
        %684 = vmatmul.mubr.f32.gmra.mrb[0].mxu0 %v612
        %v685 = vpop.f32.mrb[0].mxu0
        %v686 = vadd.f32 %v606, %v685
        %v687 = vpop.f32.mrb[0].mxu0
        %688 = vdwg.mxu0
        %689 = vadd.xlane.f32.xlu0 %v681
        %v690 = vpop.xlane.xlu0 %689
        %691 = vadd.xlane.f32.xlu0 %v686
        %v692 = vpop.xlane.xlu0 %691
        %v693 = vmul.f32 %v690, %v553
        %v694 = vmul.f32 %v692, %v553
        %v695 = vsub.f32 %v681, %v693
        %v696 = vsub.f32 %v686, %v694
        %v697 = vmul.f32 %v695, %v695
        %v698 = vmul.f32 %v696, %v696
        %699 = vadd.xlane.f32.xlu0 %v697
        %v700 = vpop.xlane.xlu0 %699
        %701 = vadd.xlane.f32.xlu0 %v698
        %v702 = vpop.xlane.xlu0 %701
        %v703 = vmul.f32 %v700, %v553
        %v704 = vmul.f32 %v702, %v553
        %v705 = vadd.f32 %v703, 1e-05
        %v706 = vadd.f32 %v704, 1e-05
        %v707 = vrsqrt.pop %v705
        %v708 = vrsqrt.pop %v706
        %v709 = vmul.f32 %v695, %v707
        %v710 = vmul.f32 %v696, %v708
        %712 = vset.pattern.permute.xlu0 0
        %713 = vperm.xlu0 %712, %v429
        %v714 = vpop.permute.xlu0 %713
        %717 = vset.pattern.permute.xlu0 0
        %718 = vperm.xlu0 %717, %v430
        %v719 = vpop.permute.xlu0 %718
        %v721 = vmul.f32 %v709, %v714
        %v722 = vmul.f32 %v710, %v719
        %724 = vset.pattern.permute.xlu0 0
        %725 = vperm.xlu0 %724, %v431
        %v726 = vpop.permute.xlu0 %725
        %729 = vset.pattern.permute.xlu0 0
        %730 = vperm.xlu0 %729, %v432
        %v731 = vpop.permute.xlu0 %730
        %v733 = vadd.f32 %v721, %v726
        %v734 = vadd.f32 %v722, %v731
        %v735 = vxor.u32 %v418, 2147483648
        %v736 = vmul.f32 %v735, 1.442695
        %v737 = vpow.pop %v736
        %v738 = vadd.f32 %v737, 1.0
        %v739 = vrcp.pop %v738
        %v740 = vmul.f32 1.0, %v739
        %v741 = vmul.f32 %v418, %v740
        %v742 = vld [vmem:[%s6] sm:$0xff]
        %v743 = vld [vmem:[%s6 + $0x8] sm:$0xff]
        %v744 = vld [vmem:[%s6 + $0x10] sm:$0xff]
        %v745 = vld [vmem:[%s6 + $0x18] sm:$0xff]
        %747 = vset.pattern.permute.xlu0 0
        %748 = vperm.xlu0 %747, %v433
        %v749 = vpop.permute.xlu0 %748
        %752 = vset.pattern.permute.xlu0 0
        %753 = vperm.xlu0 %752, %v434
        %v754 = vpop.permute.xlu0 %753
        %757 = vset.pattern.permute.xlu0 0
        %758 = vperm.xlu0 %757, %v435
        %v759 = vpop.permute.xlu0 %758
        %762 = vset.pattern.permute.xlu0 0
        %763 = vperm.xlu0 %762, %v436
        %v764 = vpop.permute.xlu0 %763
        %vm766 = vcmask 64512
        %v768 = vsel %vm766, %v742, 0
        %v771 = vsel %vm766, %v743, 0
        %v774 = vsel %vm766, %v744, 0
        %v777 = vsel %vm766, %v745, 0
        %779 = vmatprep.subr.mxu0 0.0
        %780 = vmatpush1.msra.mxu0 %v741
        %781 = vmatprep.subr.mxu0 0.0
        %782 = vmatpush1.msra.mxu0 0.0
        %783 = vmatprep.subr.mxu0 0.0
        %784 = vmatpush1.msra.mxu0 0.0
        %785 = vmatprep.subr.mxu0 0.0
        %786 = vmatpush1.msra.mxu0 0.0
        %787 = vmatprep.subr.mxu0 0.0
        %788 = vmatpush1.msra.mxu0 0.0
        %789 = vmatprep.subr.mxu0 0.0
        %790 = vmatpush1.msra.mxu0 0.0
        %791 = vmatprep.subr.mxu0 0.0
        %792 = vmatpush1.msra.mxu0 0.0
        %793 = vmatprep.subr.mxu0 0.0
        %794 = vmatpush1.msra.mxu0 0.0
        %795 = vmatprep.subr.mxu0 0.0
        %796 = vmatpush1.msra.mxu0 0.0
        %797 = vmatprep.subr.mxu0 0.0
        %798 = vmatpush1.msra.mxu0 0.0
        %799 = vmatprep.subr.mxu0 0.0
        %800 = vmatpush1.msra.mxu0 0.0
        %801 = vmatprep.subr.mxu0 0.0
        %802 = vmatpush1.msra.mxu0 0.0
        %803 = vmatprep.subr.mxu0 0.0
        %804 = vmatpush1.msra.mxu0 0.0
        %805 = vmatprep.subr.mxu0 0.0
        %806 = vmatpush1.msra.mxu0 0.0
        %807 = vmatprep.subr.mxu0 0.0
        %808 = vmatpush1.msra.mxu0 0.0
        %809 = vmatprep.subr.mxu0 0.0
        %810 = vmatpush1.msra.mxu0 0.0
        %811 = vmatprep.subr.mxu0 0.0
        %812 = vmatpush1.msra.mxu0 0.0
        %813 = vmatprep.subr.mxu0 0.0
        %814 = vmatpush1.msra.mxu0 0.0
        %815 = vmatprep.subr.mxu0 0.0
        %816 = vmatpush1.msra.mxu0 0.0
        %817 = vmatprep.subr.mxu0 0.0
        %818 = vmatpush1.msra.mxu0 0.0
        %819 = vmatprep.subr.mxu0 0.0
        %820 = vmatpush1.msra.mxu0 0.0
        %821 = vmatprep.subr.mxu0 0.0
        %822 = vmatpush1.msra.mxu0 0.0
        %823 = vmatprep.subr.mxu0 0.0
        %824 = vmatpush1.msra.mxu0 0.0
        %825 = vmatprep.subr.mxu0 0.0
        %826 = vmatpush1.msra.mxu0 0.0
        %827 = vmatprep.subr.mxu0 0.0
        %828 = vmatpush1.msra.mxu0 0.0
        %829 = vmatprep.subr.mxu0 0.0
        %830 = vmatpush1.msra.mxu0 0.0
        %831 = vmatprep.subr.mxu0 0.0
        %832 = vmatpush1.msra.mxu0 0.0
        %833 = vmatprep.subr.mxu0 0.0
        %834 = vmatpush1.msra.mxu0 0.0
        %835 = vmatprep.subr.mxu0 0.0
        %836 = vmatpush1.msra.mxu0 0.0
        %837 = vmatprep.subr.mxu0 0.0
        %838 = vmatpush1.msra.mxu0 0.0
        %839 = vmatprep.subr.mxu0 0.0
        %840 = vmatpush1.msra.mxu0 0.0
        %841 = vmatprep.subr.mxu0 0.0
        %842 = vmatpush1.msra.mxu0 0.0
        %843 = vmatprep.mubr.f32.mxu0 0.0
        %844 = vmatmul.mubr.f32.gmra.mrb[0].mxu0 %v768
        %v845 = vpop.f32.mrb[0].mxu0
        %v846 = vadd.f32 %v749, %v845
        %v847 = vpop.f32.mrb[0].mxu0
        %848 = vmatprep.mubr.f32.mxu0 0.0
        %849 = vmatmul.mubr.f32.gmra.mrb[0].mxu0 %v771
        %v850 = vpop.f32.mrb[0].mxu0
        %v851 = vadd.f32 %v754, %v850
        %v852 = vpop.f32.mrb[0].mxu0
        %853 = vmatprep.mubr.f32.mxu0 0.0
        %854 = vmatmul.mubr.f32.gmra.mrb[0].mxu0 %v774
        %v855 = vpop.f32.mrb[0].mxu0
        %v856 = vadd.f32 %v759, %v855
        %v857 = vpop.f32.mrb[0].mxu0
        %858 = vmatprep.mubr.f32.mxu0 0.0
        %859 = vmatmul.mubr.f32.gmra.mrb[0].mxu0 %v777
        %v860 = vpop.f32.mrb[0].mxu0
        %v861 = vadd.f32 %v764, %v860
        %v862 = vpop.f32.mrb[0].mxu0
        %863 = vdwg.mxu0
        %v864 = vadd.f32 %v856, 1.0
        %v865 = vadd.f32 %v861, 1.0
        %v866 = vmul.f32 %v733, %v864
        %v867 = vmul.f32 %v734, %v865
        %v868 = vadd.f32 %v866, %v846
        %v869 = vadd.f32 %v867, %v851
        %v870 = vxor.u32 %v868, 2147483648
        %v871 = vmul.f32 %v870, 1.442695
        %v872 = vpow.pop %v871
        %v873 = vadd.f32 %v872, 1.0
        %v874 = vrcp.pop %v873
        %v875 = vmul.f32 1.0, %v874
        %v876 = vtanh.pop %v869
        %v877 = vmul.f32 %v875, %v876
        %v878 = vld [vmem:[%s7] sm:$0xff]
        %v879 = vld [vmem:[%s7 + $0x8] sm:$0xff]
        %881 = vset.pattern.permute.xlu0 0
        %882 = vperm.xlu0 %881, %v437
        %v883 = vpop.permute.xlu0 %882
        %886 = vset.pattern.permute.xlu0 0
        %887 = vperm.xlu0 %886, %v438
        %v888 = vpop.permute.xlu0 %887
        %v891 = vsel %vm766, %v878, 0
        %v894 = vsel %vm766, %v879, 0
        %896 = vmatprep.subr.mxu0 0.0
        %897 = vmatpush1.msra.mxu0 %v877
        %898 = vmatprep.subr.mxu0 0.0
        %899 = vmatpush1.msra.mxu0 0.0
        %900 = vmatprep.subr.mxu0 0.0
        %901 = vmatpush1.msra.mxu0 0.0
        %902 = vmatprep.subr.mxu0 0.0
        %903 = vmatpush1.msra.mxu0 0.0
        %904 = vmatprep.subr.mxu0 0.0
        %905 = vmatpush1.msra.mxu0 0.0
        %906 = vmatprep.subr.mxu0 0.0
        %907 = vmatpush1.msra.mxu0 0.0
        %908 = vmatprep.subr.mxu0 0.0
        %909 = vmatpush1.msra.mxu0 0.0
        %910 = vmatprep.subr.mxu0 0.0
        %911 = vmatpush1.msra.mxu0 0.0
        %912 = vmatprep.subr.mxu0 0.0
        %913 = vmatpush1.msra.mxu0 0.0
        %914 = vmatprep.subr.mxu0 0.0
        %915 = vmatpush1.msra.mxu0 0.0
        %916 = vmatprep.subr.mxu0 0.0
        %917 = vmatpush1.msra.mxu0 0.0
        %918 = vmatprep.subr.mxu0 0.0
        %919 = vmatpush1.msra.mxu0 0.0
        %920 = vmatprep.subr.mxu0 0.0
        %921 = vmatpush1.msra.mxu0 0.0
        %922 = vmatprep.subr.mxu0 0.0
        %923 = vmatpush1.msra.mxu0 0.0
        %924 = vmatprep.subr.mxu0 0.0
        %925 = vmatpush1.msra.mxu0 0.0
        %926 = vmatprep.subr.mxu0 0.0
        %927 = vmatpush1.msra.mxu0 0.0
        %928 = vmatprep.subr.mxu0 0.0
        %929 = vmatpush1.msra.mxu0 0.0
        %930 = vmatprep.subr.mxu0 0.0
        %931 = vmatpush1.msra.mxu0 0.0
        %932 = vmatprep.subr.mxu0 0.0
        %933 = vmatpush1.msra.mxu0 0.0
        %934 = vmatprep.subr.mxu0 0.0
        %935 = vmatpush1.msra.mxu0 0.0
        %936 = vmatprep.subr.mxu0 0.0
        %937 = vmatpush1.msra.mxu0 0.0
        %938 = vmatprep.subr.mxu0 0.0
        %939 = vmatpush1.msra.mxu0 0.0
        %940 = vmatprep.subr.mxu0 0.0
        %941 = vmatpush1.msra.mxu0 0.0
        %942 = vmatprep.subr.mxu0 0.0
        %943 = vmatpush1.msra.mxu0 0.0
        %944 = vmatprep.subr.mxu0 0.0
        %945 = vmatpush1.msra.mxu0 0.0
        %946 = vmatprep.subr.mxu0 0.0
        %947 = vmatpush1.msra.mxu0 0.0
        %948 = vmatprep.subr.mxu0 0.0
        %949 = vmatpush1.msra.mxu0 0.0
        %950 = vmatprep.subr.mxu0 0.0
        %951 = vmatpush1.msra.mxu0 0.0
        %952 = vmatprep.subr.mxu0 0.0
        %953 = vmatpush1.msra.mxu0 0.0
        %954 = vmatprep.subr.mxu0 0.0
        %955 = vmatpush1.msra.mxu0 0.0
        %956 = vmatprep.subr.mxu0 0.0
        %957 = vmatpush1.msra.mxu0 0.0
        %958 = vmatprep.subr.mxu0 0.0
        %959 = vmatpush1.msra.mxu0 0.0
        %960 = vmatprep.mubr.f32.mxu0 0.0
        %961 = vmatmul.mubr.f32.gmra.mrb[0].mxu0 %v891
        %v962 = vpop.f32.mrb[0].mxu0
        %v963 = vadd.f32 %v883, %v962
        %v964 = vpop.f32.mrb[0].mxu0
        %965 = vmatprep.mubr.f32.mxu0 0.0
        %966 = vmatmul.mubr.f32.gmra.mrb[0].mxu0 %v894
        %v967 = vpop.f32.mrb[0].mxu0
        %v968 = vadd.f32 %v888, %v967
        %v969 = vpop.f32.mrb[0].mxu0
        %970 = vdwg.mxu0
        %v971 = vadd.f32 %v417, %v963
        %v972 = vmul.f32 %v971, 0.70710677
        %973 = vst [vmem:[%s393] sm:$0xff] %v972
        %974 = vst [vmem:[%s400] sm:$0xff] %v968
        %s975 = sand.u32 %s245, 1
        %s976 = scalar_lea.sflag [#allocation3], %s975
        %s977 = sand.u32 %s245, 1
        %s978 = smul.addr %s977, 8
        %s979 = scalar_lea.vmem [#allocation2], %s978
        %s980 = sand.u32 %s271, 1
        %s981 = scalar_lea.sflag [#allocation5], %s980
        %s982 = sand.u32 %s271, 1
        %s983 = smul.addr %s982, 8
        %s984 = scalar_lea.vmem [#allocation4], %s983
        // Predicated region
        $region57: #{tpu_custom_call.1} parent=55 // pred_check
          %p985 = pneg %p255
        $region58: #{tpu_custom_call.1} parent=55 // pred_check_branch
          %987 = sbr.rel (%p985) target = $region60
        $region59: #{tpu_custom_call.1} parent=55 // pred_region
          %s989 = ssub.s32 128, 128
          %990 = vsyncadd %s976, %s989
          %s991 = smul.addr %s28, 128
          %s992 = scalar_lea.hbm %s9, %s991
          %s994 = sshll.u32 %s979, 4
          %s995 = int_to_ptr.vmem [resolvable:$true] %s994
          %997 = dma.vmem_to_hbm [thread:$0]  %s995, 128, %s992, %s976
        $region60: #{tpu_custom_call.1} parent=55 // pred_fallthru
          _
        // Predicated region
        $region61: #{tpu_custom_call.1} parent=55 // pred_check
          %p998 = pneg %p281
        $region62: #{tpu_custom_call.1} parent=55 // pred_check_branch
          %1000 = sbr.rel (%p998) target = $region64
        $region63: #{tpu_custom_call.1} parent=55 // pred_region
          %s1002 = ssub.s32 128, 128
          %1003 = vsyncadd %s981, %s1002
          %s1004 = smul.addr %s28, 128
          %s1005 = scalar_lea.hbm %s10, %s1004
          %s1007 = sshll.u32 %s984, 4
          %s1008 = int_to_ptr.vmem [resolvable:$true] %s1007
          %1010 = dma.vmem_to_hbm [thread:$0]  %s1008, 128, %s1005, %s981
        $region64: #{tpu_custom_call.1} parent=55 // pred_fallthru
          _
      $region56: #{tpu_custom_call.1} parent=5 // pred_fallthru
        _
      %p1011 = scmp.le.s32.totalorder 2, %s23
      // Predicated region
      $region65: #{tpu_custom_call.1} parent=5 // pred_check
        %p1012 = pneg %p1011
      $region66: #{tpu_custom_call.1} parent=5 // pred_check_branch
        %1014 = sbr.rel (%p1012) target = $region68
      $region67: #{tpu_custom_call.1} parent=5 // pred_region
        %s1015 = ssub.s32 %s23, 2
        // Predicated region
        $region69: #{tpu_custom_call.1} parent=67 // pred_check
          %p1016 = pneg %p261
        $region70: #{tpu_custom_call.1} parent=67 // pred_check_branch
          %1018 = sbr.rel (%p1016) target = $region72
        $region71: #{tpu_custom_call.1} parent=67 // pred_region
          %s1019 = sand.u32 %s246, 1
          %s1020 = scalar_lea.sflag [#allocation3], %s1019
          %s1021 = sand.u32 %s246, 1
          %s1022 = smul.addr %s1021, 8
          %s1023 = scalar_lea.vmem [#allocation2], %s1022
          %1024 = dma.done %s1020, 128
        $region72: #{tpu_custom_call.1} parent=67 // pred_fallthru
          _
        // Predicated region
        $region73: #{tpu_custom_call.1} parent=67 // pred_check
          %p1025 = pneg %p287
        $region74: #{tpu_custom_call.1} parent=67 // pred_check_branch
          %1027 = sbr.rel (%p1025) target = $region76
        $region75: #{tpu_custom_call.1} parent=67 // pred_region
          %s1028 = sand.u32 %s272, 1
          %s1029 = scalar_lea.sflag [#allocation5], %s1028
          %s1030 = sand.u32 %s272, 1
          %s1031 = smul.addr %s1030, 8
          %s1032 = scalar_lea.vmem [#allocation4], %s1031
          %1033 = dma.done %s1029, 128
        $region76: #{tpu_custom_call.1} parent=67 // pred_fallthru
          _
      $region68: #{tpu_custom_call.1} parent=5 // pred_fallthru
        _
    $region6: #{tpu_custom_call.1} parent=1 // loop_footer
      %s27 = sadd.s32 1, %s23
    $region7: #{tpu_custom_call.1} parent=1 // loop_footer_branch
      %22 = sbr.rel target = $region3
    $region8: #{tpu_custom_call.1} parent=1 // loop_exit
      _
    %1034 = vsyncpa [#allocation3], 1
    %s1035 = scalar_lea.sflag [#allocation3], 1
    %1036 = vsyncpa %s1035, 1
    %1037 = vsyncpa [#allocation5], 1
    %s1038 = scalar_lea.sflag [#allocation5], 1
    %1039 = vsyncpa %s1038, 1

</llo_original>
